<compile_context>
chip_gen: v5e
topology: v5e:2x2
jax: 0.10.0
libtpu: 0.0.40
codegen_flags: <defaults>
</compile_context>

<pallas_src>
import functools

import jax
import jax.numpy as jnp
from jax.experimental import pallas as pl
from jax.experimental.pallas import tpu as pltpu


# ----------------------------------------------------------------------------
# Fused Conv2d kernel ("same" spatial size, stride 1):
# one grid step per batch element computes, entirely in VMEM,
#   out[n] = act( sum_{c,kh,kw} w[:,c,kh,kw] * shift_(kh,kw)(x[n,c]) + b )
# im2col, halo padding, bias and activation are all fused.
# ----------------------------------------------------------------------------
def _fused_conv_same_kernel(x_ref, w_ref, b_ref, o_ref, *,
                            C, OH, OW, KH, KW, PH, PW, activation):
    # x_ref: (1, C, OH*OW)   one batch element, NCHW with HxW flattened
    # w_ref: (KH*KW, O, C)   per-tap weight matrices
    # b_ref: (O, 1)
    # o_ref: (1, O, OH*OW)   lane-dense (OH*OW = 256 is a multiple of 128)
    M = OH * OW
    O = o_ref.shape[1]
    xb = x_ref[0]            # (C, M)
    wv = w_ref[...]          # (KH*KW, O, C), ~1 KB, loaded once

    # Output-pixel coordinates along the lane axis (OW is a power of two, so
    # cheap bit ops instead of vector div/mod).
    lane = jax.lax.broadcasted_iota(jnp.int32, (C, M), 1)
    ow = jnp.bitwise_and(lane, OW - 1)                 # lane % OW
    oh = jnp.right_shift(lane, OW.bit_length() - 1)    # lane // OW

    acc = jnp.zeros((O, M), jnp.float32)
    for i in range(KH):
        for j in range(KW):
            di, dj = i - PH, j - PW
            s = di * OW + dj                 # flat-lane shift of this tap
            # shifted[m] = xb[m + s]; valid output pixels never wrap because
            # the halo mask below zeroes every out-of-image tap.
            if s == 0:
                shifted = xb
            else:
                shifted = pltpu.roll(xb, shift=(-s) % M, axis=1)
            conds = []
            if di < 0:
                conds.append(oh >= -di)
            if di > 0:
                conds.append(oh < OH - di)
            if dj < 0:
                conds.append(ow >= -dj)
            if dj > 0:
                conds.append(ow < OW - dj)
            if conds:
                mask = conds[0]
                for cnd in conds[1:]:
                    mask = jnp.logical_and(mask, cnd)
                patch = jnp.where(mask, shifted, 0.0)
            else:
                patch = shifted
            t = i * KW + j
            # (O,C)x(C,M) contraction as C broadcast-FMAs on the VPU: at this
            # size the MXU would be <2% occupied either way (perf review), and
            # the (O,1)*(1,M) broadcasts keep every shape trivially lowerable.
            for c in range(C):
                acc = acc + wv[t, :, c:c + 1] * patch[c:c + 1, :]

    out = acc + b_ref[...]                   # (O,1) broadcasts over lanes
    if activation == "ReLU":
        out = jnp.maximum(out, 0.0)
    elif activation == "Sigmoid":
        out = jax.nn.sigmoid(out)
    elif activation == "Tanh":
        out = jnp.tanh(out)
    elif activation is not None:
        raise ValueError(f"Unknown activation: {activation}")
    o_ref[0] = out.astype(o_ref.dtype)


def _conv2d_fused_same(x_nchw, w_oikk, b, padding, activation):
    """Stride-1 'same'-size Conv2d, fully fused (im2col+pad+bias+act in-kernel)."""
    Nb, C, H, W = x_nchw.shape
    O, _, KH, KW = w_oikk.shape
    PH, PW = padding
    OH, OW = H, W
    M = OH * OW

    # Wrapper glue is layout plumbing only:
    #   - (N,C,H,W) -> (N,C,H*W) is a free metadata reshape,
    #   - the ~1.2 KB weight re-layout (KH*KW, O, C) and the (O,1) bias reshape
    #     are constant-sized and negligible (could be folded into param init).
    x_flat = x_nchw.reshape(Nb, C, M)
    w_taps = jnp.transpose(w_oikk, (2, 3, 0, 1)).reshape(KH * KW, O, C)
    b2 = b.reshape(O, 1)

    kernel = functools.partial(
        _fused_conv_same_kernel, C=C, OH=OH, OW=OW, KH=KH, KW=KW,
        PH=PH, PW=PW, activation=activation)

    out = pl.pallas_call(
        kernel,
        out_shape=jax.ShapeDtypeStruct((Nb, O, M), jnp.float32),
        grid=(Nb,),   # one step per batch element; >=2 parallel steps keep
                      # both v7x TensorCores busy (no-op on v5e/v6e).
        in_specs=[
            pl.BlockSpec((1, C, M), lambda n: (n, 0, 0)),
            pl.BlockSpec((KH * KW, O, C), lambda n: (0, 0, 0)),
            pl.BlockSpec((O, 1), lambda n: (0, 0)),
        ],
        out_specs=pl.BlockSpec((1, O, M), lambda n: (n, 0, 0)),
        compiler_params=pltpu.CompilerParams(
            dimension_semantics=("parallel",)),
    )(x_flat, w_taps, b2)
    return out.reshape(Nb, O, OH, OW)        # free batch-major metadata reshape


# ----------------------------------------------------------------------------
# Generic fused matmul kernel:  out = act(W @ X + b)   (lane-dense output).
# Only used for layers that are dead w.r.t. the returned tensor (never by
# default) or conv geometries the fused kernel does not cover.
# ----------------------------------------------------------------------------
def _matmul_bias_act_kernel(w_ref, x_ref, b_ref, o_ref, *, activation):
    acc = jnp.dot(w_ref[...], x_ref[...], preferred_element_type=jnp.float32)
    acc = acc + b_ref[...]                   # (N_out, 1) broadcasts over lanes
    if activation == "ReLU":
        acc = jnp.maximum(acc, 0.0)
    elif activation == "Sigmoid":
        acc = jax.nn.sigmoid(acc)
    elif activation == "Tanh":
        acc = jnp.tanh(acc)
    elif activation is not None:
        raise ValueError(f"Unknown activation: {activation}")
    o_ref[...] = acc.astype(o_ref.dtype)


def pallas_matmul_t(w, x_t, b, activation=None):
    """out = act(w @ x_t + b[:, None]); w: (N_out, K), x_t: (K, M)."""
    N_out, K = w.shape
    K2, M = x_t.shape
    assert K == K2, (K, K2)
    b2 = b.reshape(N_out, 1)

    # Hard tile cap on the lane-dense M dimension (perf review): pl.cdiv
    # handles ragged edges (overhang columns are dropped on store; M is not a
    # contraction dim so garbage in the overhang never reaches valid output).
    TILE_M = 512
    tm = M if M <= TILE_M else TILE_M
    grid = (pl.cdiv(M, tm),)
    # TODO(synk): for very large K, also tile K with a VMEM accumulator and set
    # vmem_limit_bytes via pltpu.CompilerParams (v5e 16 MiB / v7x 32 MiB scoped
    # defaults, 64 MiB physical on v7x).

    kernel = functools.partial(_matmul_bias_act_kernel, activation=activation)
    return pl.pallas_call(
        kernel,
        out_shape=jax.ShapeDtypeStruct((N_out, M), jnp.float32),
        grid=grid,
        in_specs=[
            pl.BlockSpec((N_out, K), lambda i: (0, 0)),
            pl.BlockSpec((K, tm), lambda i: (0, i)),
            pl.BlockSpec((N_out, 1), lambda i: (0, 0)),
        ],
        out_specs=pl.BlockSpec((N_out, tm), lambda i: (0, i)),
        compiler_params=pltpu.CompilerParams(
            dimension_semantics=("parallel",)),
    )(w, x_t, b2)


def conv2d_pallas(x_nchw, w_oikk, b, stride, padding, activation=None):
    """Matches torch.nn.Conv2d semantics.  x: (N,C,H,W); w: (O,C,KH,KW)."""
    Nb, C, H, W = x_nchw.shape
    O, _, KH, KW = w_oikk.shape
    sh, sw = stride
    ph, pw = padding
    OH = (H + 2 * ph - KH) // sh + 1
    OW = (W + 2 * pw - KW) // sw + 1

    same_size = (sh == 1 and sw == 1 and OH == H and OW == W)
    pow2_w = W > 0 and (W & (W - 1)) == 0
    if same_size and pow2_w:
        # Hot path (conv1): single fused kernel, no XLA glue.
        return _conv2d_fused_same(x_nchw, w_oikk, b, (ph, pw), activation)

    # Fallback (im2col in XLA + fused matmul kernel) — only reached for layers
    # outside the returned value's dependency closure, never by default.
    xp = jnp.pad(x_nchw, ((0, 0), (0, 0), (ph, ph), (pw, pw)))
    xc = jnp.transpose(xp, (1, 0, 2, 3))      # (C, N, Hp, Wp)
    taps = []
    for i in range(KH):
        for j in range(KW):
            taps.append(xc[:, :, i:i + sh * OH:sh, j:j + sw * OW:sw])
    patches_t = jnp.stack(taps, axis=1).reshape(C * KH * KW, Nb * OH * OW)
    w_mat = w_oikk.reshape(O, C * KH * KW)
    out_t = pallas_matmul_t(w_mat, patches_t, b, activation=activation)
    out = out_t.reshape(O, Nb, OH, OW)
    return jnp.transpose(out, (1, 0, 2, 3))


def linear_pallas(x, w, b, activation=None):
    """x: (N, F) or (N,C,H,W); w: (out, in) PyTorch layout; returns (N, out)."""
    if x.ndim > 2:
        x = x.reshape(x.shape[0], -1)         # nn.Flatten over NCHW
    out_t = pallas_matmul_t(w, x.T, b, activation=activation)  # (out, N)
    return out_t.T


# ----------------------------------------------------------------------------
# ConfigurableNN instantiation
# ----------------------------------------------------------------------------
CONFIG = {
    "connections": {
        "conv1": "input",   # not a layer name -> receives x
        "conv2": "conv1",
        "fc1": "conv2",
        "fc2": "fc1",
    },
    "layers": {
        "conv1": {"type": "Conv2d",
                  "params": {"out": 8, "f": (3, 3), "s": (1, 1), "p": (1, 1)},
                  "activation": "ReLU"},
        "conv2": {"type": "Conv2d",
                  "params": {"out": 8, "f": (3, 3), "s": (2, 2), "p": (1, 1)},
                  "activation": "ReLU"},
        "fc1": {"type": "Linear", "out": 32, "activation": "ReLU"},
        "fc2": {"type": "Linear", "out": 10},
    },
}
INPUT_SIZE = [4, 16, 16]   # (C, H, W)


def init_params(config, input_size, key):
    """Deterministic parameter init following the module's shape bookkeeping."""
    params = {}
    size = list(input_size)
    for layer_name in config["connections"]:
        cfg = config["layers"][layer_name]
        ltype = cfg["type"]
        key, k1, k2 = jax.random.split(key, 3)
        if ltype == "Linear":
            if isinstance(size, (list, tuple)) and len(size) > 1:
                c, h, w = size
                in_features = c * h * w
            else:
                in_features = size if isinstance(size, int) else size[0]
            out_features = cfg["out"]
            scale = 1.0 / jnp.sqrt(in_features)
            params[layer_name] = {
                # PyTorch Linear weight is (out, in); kept as-is.
                "w": jax.random.uniform(k1, (out_features, in_features),
                                        jnp.float32, -scale, scale),
                "b": jax.random.uniform(k2, (out_features,),
                                        jnp.float32, -scale, scale),
            }
            size = out_features
        elif ltype == "Conv2d":
            c, h, w = size
            p = cfg["params"]
            out, (kh, kw), (sh, sw), (ph, pw) = p["out"], p["f"], p["s"], p["p"]
            fan_in = c * kh * kw
            scale = 1.0 / jnp.sqrt(fan_in)
            params[layer_name] = {
                "w": jax.random.uniform(k1, (out, c, kh, kw),
                                        jnp.float32, -scale, scale),
                "b": jax.random.uniform(k2, (out,), jnp.float32, -scale, scale),
            }
            h = (h + 2 * ph - kh) // sh + 1
            w = (w + 2 * pw - kw) // sw + 1
            size = [out, h, w]
        else:
            # TODO(synk): BatchNorm1d/2d and Dropout layer types exist in the
            # reference module but are not used in this concrete config.
            raise ValueError(f"Unsupported layer type in this config: {ltype}")
    return params


def apply_layer(layer_name, x, params):
    cfg = CONFIG["layers"][layer_name]
    ltype = cfg["type"]
    act = cfg.get("activation")
    p = params[layer_name]
    if ltype == "Conv2d":
        lp = cfg["params"]
        return conv2d_pallas(x, p["w"], p["b"],
                             stride=lp["s"], padding=lp["p"], activation=act)
    elif ltype == "Linear":
        return linear_pallas(x, p["w"], p["b"], activation=act)
    else:
        raise ValueError(f"Unknown layer type: {ltype}")


def _needed_layers(connections, target):
    """Dependency closure of `target` within the layer graph."""
    needed, stack = set(), [target]
    while stack:
        name = stack.pop()
        if name in needed or name not in connections:
            continue
        needed.add(name)
        inputs = connections[name]
        for inp in (inputs if isinstance(inputs, list) else [inputs]):
            if inp in connections:
                stack.append(inp)
    return needed


def configurable_nn_forward(x, params, compute_dead_layers=False):
    connections = CONFIG["connections"]
    layer_names = list(connections.keys())
    returned = layer_names[0]   # reference module returns the FIRST layer's output
    needed = _needed_layers(connections, returned)
    layer_outputs = {}
    for name in layer_names:
        if not compute_dead_layers and name not in needed:
            continue  # dead w.r.t. the returned tensor (conv2/fc1/fc2)
        inputs = connections[name]
        if isinstance(inputs, list):
            layer_input = jnp.concatenate(
                [layer_outputs[n] for n in inputs], axis=1)
        else:
            layer_input = layer_outputs[inputs] if inputs in layer_outputs else x
        layer_outputs[name] = apply_layer(name, layer_input, params)
    return layer_outputs[returned]


if __name__ == "__main__":
    key = jax.random.PRNGKey(0)
    key, xkey, pkey = jax.random.split(key, 3)

    batch = 2
    x = jax.random.normal(xkey, (batch, *INPUT_SIZE), dtype=jnp.float32)
    params = init_params(CONFIG, INPUT_SIZE, pkey)

    out = jax.jit(configurable_nn_forward)(x, params)
    out = jax.block_until_ready(out)

    # Returned tensor is conv1's output: (N, 8, 16, 16), ReLU'd (non-negative).
    assert out.shape == (batch, 8, 16, 16), out.shape
    assert out.dtype == jnp.float32
    assert bool(jnp.all(out >= 0.0))

    # Plain-JAX reference check of the returned layer (conv1 + ReLU).
    wp, bp = params["conv1"]["w"], params["conv1"]["b"]
    ref = jax.lax.conv_general_dilated(
        x, wp, window_strides=(1, 1), padding=((1, 1), (1, 1)),
        dimension_numbers=("NCHW", "OIHW", "NCHW"),
        precision=jax.lax.Precision.HIGHEST)
    ref = jnp.maximum(ref + bp[None, :, None, None], 0.0)
    max_err = float(jnp.max(jnp.abs(out - ref)))
    assert max_err < 2e-3, f"mismatch vs reference conv: {max_err}"

    print("KERNEL_OK")
</pallas_src>

<mosaic_0001>
module attributes {stable_mosaic.version = 11 : i64} {
  func.func @_fused_conv_same_kernel(%arg0: i32, %arg1: memref<1x4x256xf32, #tpu.memory_space<vmem>>, %arg2: memref<9x8x4xf32, #tpu.memory_space<vmem>>, %arg3: memref<8x1xf32, #tpu.memory_space<vmem>>, %arg4: memref<1x8x256xf32, #tpu.memory_space<vmem>>) attributes {dimension_semantics = [#tpu.dimension_semantics<parallel>], iteration_bounds = array<i64: 2>, scalar_prefetch = 0 : i64, scratch_operands = 0 : i64, tpu.core_type = #tpu.core_type<tc>, window_params = [{transform_indices = @transform_0, window_bounds = array<i64: 1, 4, 256>}, {pipeline_mode = #tpu.pipeline_mode<synchronous>, transform_indices = @transform_1, window_bounds = array<i64: 9, 8, 4>}, {pipeline_mode = #tpu.pipeline_mode<synchronous>, transform_indices = @transform_2, window_bounds = array<i64: 8, 1>}, {transform_indices = @transform_3, window_bounds = array<i64: 1, 8, 256>}]} {
    %c0 = arith.constant 0 : index
    %c0_0 = arith.constant 0 : index
    %c0_1 = arith.constant 0 : index
    %0 = vector.load %arg1[%c0, %c0_0, %c0_1] : memref<1x4x256xf32, #tpu.memory_space<vmem>>, vector<1x4x256xf32>
    %1 = vector.shape_cast %0 : vector<1x4x256xf32> to vector<4x256xf32>
    %c0_2 = arith.constant 0 : index
    %c0_3 = arith.constant 0 : index
    %c0_4 = arith.constant 0 : index
    %2 = vector.load %arg2[%c0_2, %c0_3, %c0_4] : memref<9x8x4xf32, #tpu.memory_space<vmem>>, vector<9x8x4xf32>
    %3 = tpu.iota {dimensions = array<i32: 1>} : vector<4x256xi32>
    %c15_i32 = arith.constant 15 : i32
    %4 = vector.broadcast %c15_i32 : i32 to vector<4x256xi32>
    %5 = arith.andi %3, %4 : vector<4x256xi32>
    %c4_i32 = arith.constant 4 : i32
    %6 = vector.broadcast %c4_i32 : i32 to vector<4x256xi32>
    %7 = arith.shrsi %3, %6 : vector<4x256xi32>
    %cst = arith.constant 0.000000e+00 : f32
    %8 = vector.broadcast %cst : f32 to vector<8x256xf32>
    %c17_i32 = arith.constant 17 : i32
    %9 = tpu.dynamic_rotate %1 by %c17_i32 dim 1 : vector<4x256xf32>, i32 -> vector<4x256xf32>
    %c1_i32 = arith.constant 1 : i32
    %10 = vector.broadcast %c1_i32 : i32 to vector<4x256xi32>
    %11 = arith.cmpi sge, %7, %10 : vector<4x256xi32>
    %c1_i32_5 = arith.constant 1 : i32
    %12 = vector.broadcast %c1_i32_5 : i32 to vector<4x256xi32>
    %13 = arith.cmpi sge, %5, %12 : vector<4x256xi32>
    %14 = arith.andi %11, %13 : vector<4x256xi1>
    %cst_6 = arith.constant 0.000000e+00 : f32
    %15 = vector.broadcast %cst_6 : f32 to vector<4x256xf32>
    %16 = arith.select %14, %9, %15 : vector<4x256xi1>, vector<4x256xf32>
    %17 = vector.extract_strided_slice %2 {offsets = [0, 0, 0], sizes = [1, 8, 1], strides = [1, 1, 1]} : vector<9x8x4xf32> to vector<1x8x1xf32>
    %18 = vector.shape_cast %17 : vector<1x8x1xf32> to vector<8x1xf32>
    %19 = vector.extract_strided_slice %16 {offsets = [0, 0], sizes = [1, 256], strides = [1, 1]} : vector<4x256xf32> to vector<1x256xf32>
    %20 = vector.broadcast %18 : vector<8x1xf32> to vector<8x256xf32>
    %21 = vector.broadcast %19 : vector<1x256xf32> to vector<8x256xf32>
    %22 = arith.mulf %20, %21 : vector<8x256xf32>
    %23 = arith.addf %8, %22 : vector<8x256xf32>
    %24 = vector.extract_strided_slice %2 {offsets = [0, 0, 1], sizes = [1, 8, 1], strides = [1, 1, 1]} : vector<9x8x4xf32> to vector<1x8x1xf32>
    %25 = vector.shape_cast %24 : vector<1x8x1xf32> to vector<8x1xf32>
    %26 = vector.extract_strided_slice %16 {offsets = [1, 0], sizes = [1, 256], strides = [1, 1]} : vector<4x256xf32> to vector<1x256xf32>
    %27 = vector.broadcast %25 : vector<8x1xf32> to vector<8x256xf32>
    %28 = vector.broadcast %26 : vector<1x256xf32> to vector<8x256xf32>
    %29 = arith.mulf %27, %28 : vector<8x256xf32>
    %30 = arith.addf %23, %29 : vector<8x256xf32>
    %31 = vector.extract_strided_slice %2 {offsets = [0, 0, 2], sizes = [1, 8, 1], strides = [1, 1, 1]} : vector<9x8x4xf32> to vector<1x8x1xf32>
    %32 = vector.shape_cast %31 : vector<1x8x1xf32> to vector<8x1xf32>
    %33 = vector.extract_strided_slice %16 {offsets = [2, 0], sizes = [1, 256], strides = [1, 1]} : vector<4x256xf32> to vector<1x256xf32>
    %34 = vector.broadcast %32 : vector<8x1xf32> to vector<8x256xf32>
    %35 = vector.broadcast %33 : vector<1x256xf32> to vector<8x256xf32>
    %36 = arith.mulf %34, %35 : vector<8x256xf32>
    %37 = arith.addf %30, %36 : vector<8x256xf32>
    %38 = vector.extract_strided_slice %2 {offsets = [0, 0, 3], sizes = [1, 8, 1], strides = [1, 1, 1]} : vector<9x8x4xf32> to vector<1x8x1xf32>
    %39 = vector.shape_cast %38 : vector<1x8x1xf32> to vector<8x1xf32>
    %40 = vector.extract_strided_slice %16 {offsets = [3, 0], sizes = [1, 256], strides = [1, 1]} : vector<4x256xf32> to vector<1x256xf32>
    %41 = vector.broadcast %39 : vector<8x1xf32> to vector<8x256xf32>
    %42 = vector.broadcast %40 : vector<1x256xf32> to vector<8x256xf32>
    %43 = arith.mulf %41, %42 : vector<8x256xf32>
    %44 = arith.addf %37, %43 : vector<8x256xf32>
    %c16_i32 = arith.constant 16 : i32
    %45 = tpu.dynamic_rotate %1 by %c16_i32 dim 1 : vector<4x256xf32>, i32 -> vector<4x256xf32>
    %c1_i32_7 = arith.constant 1 : i32
    %46 = vector.broadcast %c1_i32_7 : i32 to vector<4x256xi32>
    %47 = arith.cmpi sge, %7, %46 : vector<4x256xi32>
    %cst_8 = arith.constant 0.000000e+00 : f32
    %48 = vector.broadcast %cst_8 : f32 to vector<4x256xf32>
    %49 = arith.select %47, %45, %48 : vector<4x256xi1>, vector<4x256xf32>
    %50 = vector.extract_strided_slice %2 {offsets = [1, 0, 0], sizes = [1, 8, 1], strides = [1, 1, 1]} : vector<9x8x4xf32> to vector<1x8x1xf32>
    %51 = vector.shape_cast %50 : vector<1x8x1xf32> to vector<8x1xf32>
    %52 = vector.extract_strided_slice %49 {offsets = [0, 0], sizes = [1, 256], strides = [1, 1]} : vector<4x256xf32> to vector<1x256xf32>
    %53 = vector.broadcast %51 : vector<8x1xf32> to vector<8x256xf32>
    %54 = vector.broadcast %52 : vector<1x256xf32> to vector<8x256xf32>
    %55 = arith.mulf %53, %54 : vector<8x256xf32>
    %56 = arith.addf %44, %55 : vector<8x256xf32>
    %57 = vector.extract_strided_slice %2 {offsets = [1, 0, 1], sizes = [1, 8, 1], strides = [1, 1, 1]} : vector<9x8x4xf32> to vector<1x8x1xf32>
    %58 = vector.shape_cast %57 : vector<1x8x1xf32> to vector<8x1xf32>
    %59 = vector.extract_strided_slice %49 {offsets = [1, 0], sizes = [1, 256], strides = [1, 1]} : vector<4x256xf32> to vector<1x256xf32>
    %60 = vector.broadcast %58 : vector<8x1xf32> to vector<8x256xf32>
    %61 = vector.broadcast %59 : vector<1x256xf32> to vector<8x256xf32>
    %62 = arith.mulf %60, %61 : vector<8x256xf32>
    %63 = arith.addf %56, %62 : vector<8x256xf32>
    %64 = vector.extract_strided_slice %2 {offsets = [1, 0, 2], sizes = [1, 8, 1], strides = [1, 1, 1]} : vector<9x8x4xf32> to vector<1x8x1xf32>
    %65 = vector.shape_cast %64 : vector<1x8x1xf32> to vector<8x1xf32>
    %66 = vector.extract_strided_slice %49 {offsets = [2, 0], sizes = [1, 256], strides = [1, 1]} : vector<4x256xf32> to vector<1x256xf32>
    %67 = vector.broadcast %65 : vector<8x1xf32> to vector<8x256xf32>
    %68 = vector.broadcast %66 : vector<1x256xf32> to vector<8x256xf32>
    %69 = arith.mulf %67, %68 : vector<8x256xf32>
    %70 = arith.addf %63, %69 : vector<8x256xf32>
    %71 = vector.extract_strided_slice %2 {offsets = [1, 0, 3], sizes = [1, 8, 1], strides = [1, 1, 1]} : vector<9x8x4xf32> to vector<1x8x1xf32>
    %72 = vector.shape_cast %71 : vector<1x8x1xf32> to vector<8x1xf32>
    %73 = vector.extract_strided_slice %49 {offsets = [3, 0], sizes = [1, 256], strides = [1, 1]} : vector<4x256xf32> to vector<1x256xf32>
    %74 = vector.broadcast %72 : vector<8x1xf32> to vector<8x256xf32>
    %75 = vector.broadcast %73 : vector<1x256xf32> to vector<8x256xf32>
    %76 = arith.mulf %74, %75 : vector<8x256xf32>
    %77 = arith.addf %70, %76 : vector<8x256xf32>
    %c15_i32_9 = arith.constant 15 : i32
    %78 = tpu.dynamic_rotate %1 by %c15_i32_9 dim 1 : vector<4x256xf32>, i32 -> vector<4x256xf32>
    %c1_i32_10 = arith.constant 1 : i32
    %79 = vector.broadcast %c1_i32_10 : i32 to vector<4x256xi32>
    %80 = arith.cmpi sge, %7, %79 : vector<4x256xi32>
    %c15_i32_11 = arith.constant 15 : i32
    %81 = vector.broadcast %c15_i32_11 : i32 to vector<4x256xi32>
    %82 = arith.cmpi slt, %5, %81 : vector<4x256xi32>
    %83 = arith.andi %80, %82 : vector<4x256xi1>
    %cst_12 = arith.constant 0.000000e+00 : f32
    %84 = vector.broadcast %cst_12 : f32 to vector<4x256xf32>
    %85 = arith.select %83, %78, %84 : vector<4x256xi1>, vector<4x256xf32>
    %86 = vector.extract_strided_slice %2 {offsets = [2, 0, 0], sizes = [1, 8, 1], strides = [1, 1, 1]} : vector<9x8x4xf32> to vector<1x8x1xf32>
    %87 = vector.shape_cast %86 : vector<1x8x1xf32> to vector<8x1xf32>
    %88 = vector.extract_strided_slice %85 {offsets = [0, 0], sizes = [1, 256], strides = [1, 1]} : vector<4x256xf32> to vector<1x256xf32>
    %89 = vector.broadcast %87 : vector<8x1xf32> to vector<8x256xf32>
    %90 = vector.broadcast %88 : vector<1x256xf32> to vector<8x256xf32>
    %91 = arith.mulf %89, %90 : vector<8x256xf32>
    %92 = arith.addf %77, %91 : vector<8x256xf32>
    %93 = vector.extract_strided_slice %2 {offsets = [2, 0, 1], sizes = [1, 8, 1], strides = [1, 1, 1]} : vector<9x8x4xf32> to vector<1x8x1xf32>
    %94 = vector.shape_cast %93 : vector<1x8x1xf32> to vector<8x1xf32>
    %95 = vector.extract_strided_slice %85 {offsets = [1, 0], sizes = [1, 256], strides = [1, 1]} : vector<4x256xf32> to vector<1x256xf32>
    %96 = vector.broadcast %94 : vector<8x1xf32> to vector<8x256xf32>
    %97 = vector.broadcast %95 : vector<1x256xf32> to vector<8x256xf32>
    %98 = arith.mulf %96, %97 : vector<8x256xf32>
    %99 = arith.addf %92, %98 : vector<8x256xf32>
    %100 = vector.extract_strided_slice %2 {offsets = [2, 0, 2], sizes = [1, 8, 1], strides = [1, 1, 1]} : vector<9x8x4xf32> to vector<1x8x1xf32>
    %101 = vector.shape_cast %100 : vector<1x8x1xf32> to vector<8x1xf32>
    %102 = vector.extract_strided_slice %85 {offsets = [2, 0], sizes = [1, 256], strides = [1, 1]} : vector<4x256xf32> to vector<1x256xf32>
    %103 = vector.broadcast %101 : vector<8x1xf32> to vector<8x256xf32>
    %104 = vector.broadcast %102 : vector<1x256xf32> to vector<8x256xf32>
    %105 = arith.mulf %103, %104 : vector<8x256xf32>
    %106 = arith.addf %99, %105 : vector<8x256xf32>
    %107 = vector.extract_strided_slice %2 {offsets = [2, 0, 3], sizes = [1, 8, 1], strides = [1, 1, 1]} : vector<9x8x4xf32> to vector<1x8x1xf32>
    %108 = vector.shape_cast %107 : vector<1x8x1xf32> to vector<8x1xf32>
    %109 = vector.extract_strided_slice %85 {offsets = [3, 0], sizes = [1, 256], strides = [1, 1]} : vector<4x256xf32> to vector<1x256xf32>
    %110 = vector.broadcast %108 : vector<8x1xf32> to vector<8x256xf32>
    %111 = vector.broadcast %109 : vector<1x256xf32> to vector<8x256xf32>
    %112 = arith.mulf %110, %111 : vector<8x256xf32>
    %113 = arith.addf %106, %112 : vector<8x256xf32>
    %c1_i32_13 = arith.constant 1 : i32
    %114 = tpu.dynamic_rotate %1 by %c1_i32_13 dim 1 : vector<4x256xf32>, i32 -> vector<4x256xf32>
    %c1_i32_14 = arith.constant 1 : i32
    %115 = vector.broadcast %c1_i32_14 : i32 to vector<4x256xi32>
    %116 = arith.cmpi sge, %5, %115 : vector<4x256xi32>
    %cst_15 = arith.constant 0.000000e+00 : f32
    %117 = vector.broadcast %cst_15 : f32 to vector<4x256xf32>
    %118 = arith.select %116, %114, %117 : vector<4x256xi1>, vector<4x256xf32>
    %119 = vector.extract_strided_slice %2 {offsets = [3, 0, 0], sizes = [1, 8, 1], strides = [1, 1, 1]} : vector<9x8x4xf32> to vector<1x8x1xf32>
    %120 = vector.shape_cast %119 : vector<1x8x1xf32> to vector<8x1xf32>
    %121 = vector.extract_strided_slice %118 {offsets = [0, 0], sizes = [1, 256], strides = [1, 1]} : vector<4x256xf32> to vector<1x256xf32>
    %122 = vector.broadcast %120 : vector<8x1xf32> to vector<8x256xf32>
    %123 = vector.broadcast %121 : vector<1x256xf32> to vector<8x256xf32>
    %124 = arith.mulf %122, %123 : vector<8x256xf32>
    %125 = arith.addf %113, %124 : vector<8x256xf32>
    %126 = vector.extract_strided_slice %2 {offsets = [3, 0, 1], sizes = [1, 8, 1], strides = [1, 1, 1]} : vector<9x8x4xf32> to vector<1x8x1xf32>
    %127 = vector.shape_cast %126 : vector<1x8x1xf32> to vector<8x1xf32>
    %128 = vector.extract_strided_slice %118 {offsets = [1, 0], sizes = [1, 256], strides = [1, 1]} : vector<4x256xf32> to vector<1x256xf32>
    %129 = vector.broadcast %127 : vector<8x1xf32> to vector<8x256xf32>
    %130 = vector.broadcast %128 : vector<1x256xf32> to vector<8x256xf32>
    %131 = arith.mulf %129, %130 : vector<8x256xf32>
    %132 = arith.addf %125, %131 : vector<8x256xf32>
    %133 = vector.extract_strided_slice %2 {offsets = [3, 0, 2], sizes = [1, 8, 1], strides = [1, 1, 1]} : vector<9x8x4xf32> to vector<1x8x1xf32>
    %134 = vector.shape_cast %133 : vector<1x8x1xf32> to vector<8x1xf32>
    %135 = vector.extract_strided_slice %118 {offsets = [2, 0], sizes = [1, 256], strides = [1, 1]} : vector<4x256xf32> to vector<1x256xf32>
    %136 = vector.broadcast %134 : vector<8x1xf32> to vector<8x256xf32>
    %137 = vector.broadcast %135 : vector<1x256xf32> to vector<8x256xf32>
    %138 = arith.mulf %136, %137 : vector<8x256xf32>
    %139 = arith.addf %132, %138 : vector<8x256xf32>
    %140 = vector.extract_strided_slice %2 {offsets = [3, 0, 3], sizes = [1, 8, 1], strides = [1, 1, 1]} : vector<9x8x4xf32> to vector<1x8x1xf32>
    %141 = vector.shape_cast %140 : vector<1x8x1xf32> to vector<8x1xf32>
    %142 = vector.extract_strided_slice %118 {offsets = [3, 0], sizes = [1, 256], strides = [1, 1]} : vector<4x256xf32> to vector<1x256xf32>
    %143 = vector.broadcast %141 : vector<8x1xf32> to vector<8x256xf32>
    %144 = vector.broadcast %142 : vector<1x256xf32> to vector<8x256xf32>
    %145 = arith.mulf %143, %144 : vector<8x256xf32>
    %146 = arith.addf %139, %145 : vector<8x256xf32>
    %147 = vector.extract_strided_slice %2 {offsets = [4, 0, 0], sizes = [1, 8, 1], strides = [1, 1, 1]} : vector<9x8x4xf32> to vector<1x8x1xf32>
    %148 = vector.shape_cast %147 : vector<1x8x1xf32> to vector<8x1xf32>
    %149 = vector.extract_strided_slice %1 {offsets = [0, 0], sizes = [1, 256], strides = [1, 1]} : vector<4x256xf32> to vector<1x256xf32>
    %150 = vector.broadcast %148 : vector<8x1xf32> to vector<8x256xf32>
    %151 = vector.broadcast %149 : vector<1x256xf32> to vector<8x256xf32>
    %152 = arith.mulf %150, %151 : vector<8x256xf32>
    %153 = arith.addf %146, %152 : vector<8x256xf32>
    %154 = vector.extract_strided_slice %2 {offsets = [4, 0, 1], sizes = [1, 8, 1], strides = [1, 1, 1]} : vector<9x8x4xf32> to vector<1x8x1xf32>
    %155 = vector.shape_cast %154 : vector<1x8x1xf32> to vector<8x1xf32>
    %156 = vector.extract_strided_slice %1 {offsets = [1, 0], sizes = [1, 256], strides = [1, 1]} : vector<4x256xf32> to vector<1x256xf32>
    %157 = vector.broadcast %155 : vector<8x1xf32> to vector<8x256xf32>
    %158 = vector.broadcast %156 : vector<1x256xf32> to vector<8x256xf32>
    %159 = arith.mulf %157, %158 : vector<8x256xf32>
    %160 = arith.addf %153, %159 : vector<8x256xf32>
    %161 = vector.extract_strided_slice %2 {offsets = [4, 0, 2], sizes = [1, 8, 1], strides = [1, 1, 1]} : vector<9x8x4xf32> to vector<1x8x1xf32>
    %162 = vector.shape_cast %161 : vector<1x8x1xf32> to vector<8x1xf32>
    %163 = vector.extract_strided_slice %1 {offsets = [2, 0], sizes = [1, 256], strides = [1, 1]} : vector<4x256xf32> to vector<1x256xf32>
    %164 = vector.broadcast %162 : vector<8x1xf32> to vector<8x256xf32>
    %165 = vector.broadcast %163 : vector<1x256xf32> to vector<8x256xf32>
    %166 = arith.mulf %164, %165 : vector<8x256xf32>
    %167 = arith.addf %160, %166 : vector<8x256xf32>
    %168 = vector.extract_strided_slice %2 {offsets = [4, 0, 3], sizes = [1, 8, 1], strides = [1, 1, 1]} : vector<9x8x4xf32> to vector<1x8x1xf32>
    %169 = vector.shape_cast %168 : vector<1x8x1xf32> to vector<8x1xf32>
    %170 = vector.extract_strided_slice %1 {offsets = [3, 0], sizes = [1, 256], strides = [1, 1]} : vector<4x256xf32> to vector<1x256xf32>
    %171 = vector.broadcast %169 : vector<8x1xf32> to vector<8x256xf32>
    %172 = vector.broadcast %170 : vector<1x256xf32> to vector<8x256xf32>
    %173 = arith.mulf %171, %172 : vector<8x256xf32>
    %174 = arith.addf %167, %173 : vector<8x256xf32>
    %c255_i32 = arith.constant 255 : i32
    %175 = tpu.dynamic_rotate %1 by %c255_i32 dim 1 : vector<4x256xf32>, i32 -> vector<4x256xf32>
    %c15_i32_16 = arith.constant 15 : i32
    %176 = vector.broadcast %c15_i32_16 : i32 to vector<4x256xi32>
    %177 = arith.cmpi slt, %5, %176 : vector<4x256xi32>
    %cst_17 = arith.constant 0.000000e+00 : f32
    %178 = vector.broadcast %cst_17 : f32 to vector<4x256xf32>
    %179 = arith.select %177, %175, %178 : vector<4x256xi1>, vector<4x256xf32>
    %180 = vector.extract_strided_slice %2 {offsets = [5, 0, 0], sizes = [1, 8, 1], strides = [1, 1, 1]} : vector<9x8x4xf32> to vector<1x8x1xf32>
    %181 = vector.shape_cast %180 : vector<1x8x1xf32> to vector<8x1xf32>
    %182 = vector.extract_strided_slice %179 {offsets = [0, 0], sizes = [1, 256], strides = [1, 1]} : vector<4x256xf32> to vector<1x256xf32>
    %183 = vector.broadcast %181 : vector<8x1xf32> to vector<8x256xf32>
    %184 = vector.broadcast %182 : vector<1x256xf32> to vector<8x256xf32>
    %185 = arith.mulf %183, %184 : vector<8x256xf32>
    %186 = arith.addf %174, %185 : vector<8x256xf32>
    %187 = vector.extract_strided_slice %2 {offsets = [5, 0, 1], sizes = [1, 8, 1], strides = [1, 1, 1]} : vector<9x8x4xf32> to vector<1x8x1xf32>
    %188 = vector.shape_cast %187 : vector<1x8x1xf32> to vector<8x1xf32>
    %189 = vector.extract_strided_slice %179 {offsets = [1, 0], sizes = [1, 256], strides = [1, 1]} : vector<4x256xf32> to vector<1x256xf32>
    %190 = vector.broadcast %188 : vector<8x1xf32> to vector<8x256xf32>
    %191 = vector.broadcast %189 : vector<1x256xf32> to vector<8x256xf32>
    %192 = arith.mulf %190, %191 : vector<8x256xf32>
    %193 = arith.addf %186, %192 : vector<8x256xf32>
    %194 = vector.extract_strided_slice %2 {offsets = [5, 0, 2], sizes = [1, 8, 1], strides = [1, 1, 1]} : vector<9x8x4xf32> to vector<1x8x1xf32>
    %195 = vector.shape_cast %194 : vector<1x8x1xf32> to vector<8x1xf32>
    %196 = vector.extract_strided_slice %179 {offsets = [2, 0], sizes = [1, 256], strides = [1, 1]} : vector<4x256xf32> to vector<1x256xf32>
    %197 = vector.broadcast %195 : vector<8x1xf32> to vector<8x256xf32>
    %198 = vector.broadcast %196 : vector<1x256xf32> to vector<8x256xf32>
    %199 = arith.mulf %197, %198 : vector<8x256xf32>
    %200 = arith.addf %193, %199 : vector<8x256xf32>
    %201 = vector.extract_strided_slice %2 {offsets = [5, 0, 3], sizes = [1, 8, 1], strides = [1, 1, 1]} : vector<9x8x4xf32> to vector<1x8x1xf32>
    %202 = vector.shape_cast %201 : vector<1x8x1xf32> to vector<8x1xf32>
    %203 = vector.extract_strided_slice %179 {offsets = [3, 0], sizes = [1, 256], strides = [1, 1]} : vector<4x256xf32> to vector<1x256xf32>
    %204 = vector.broadcast %202 : vector<8x1xf32> to vector<8x256xf32>
    %205 = vector.broadcast %203 : vector<1x256xf32> to vector<8x256xf32>
    %206 = arith.mulf %204, %205 : vector<8x256xf32>
    %207 = arith.addf %200, %206 : vector<8x256xf32>
    %c241_i32 = arith.constant 241 : i32
    %208 = tpu.dynamic_rotate %1 by %c241_i32 dim 1 : vector<4x256xf32>, i32 -> vector<4x256xf32>
    %c15_i32_18 = arith.constant 15 : i32
    %209 = vector.broadcast %c15_i32_18 : i32 to vector<4x256xi32>
    %210 = arith.cmpi slt, %7, %209 : vector<4x256xi32>
    %c1_i32_19 = arith.constant 1 : i32
    %211 = vector.broadcast %c1_i32_19 : i32 to vector<4x256xi32>
    %212 = arith.cmpi sge, %5, %211 : vector<4x256xi32>
    %213 = arith.andi %210, %212 : vector<4x256xi1>
    %cst_20 = arith.constant 0.000000e+00 : f32
    %214 = vector.broadcast %cst_20 : f32 to vector<4x256xf32>
    %215 = arith.select %213, %208, %214 : vector<4x256xi1>, vector<4x256xf32>
    %216 = vector.extract_strided_slice %2 {offsets = [6, 0, 0], sizes = [1, 8, 1], strides = [1, 1, 1]} : vector<9x8x4xf32> to vector<1x8x1xf32>
    %217 = vector.shape_cast %216 : vector<1x8x1xf32> to vector<8x1xf32>
    %218 = vector.extract_strided_slice %215 {offsets = [0, 0], sizes = [1, 256], strides = [1, 1]} : vector<4x256xf32> to vector<1x256xf32>
    %219 = vector.broadcast %217 : vector<8x1xf32> to vector<8x256xf32>
    %220 = vector.broadcast %218 : vector<1x256xf32> to vector<8x256xf32>
    %221 = arith.mulf %219, %220 : vector<8x256xf32>
    %222 = arith.addf %207, %221 : vector<8x256xf32>
    %223 = vector.extract_strided_slice %2 {offsets = [6, 0, 1], sizes = [1, 8, 1], strides = [1, 1, 1]} : vector<9x8x4xf32> to vector<1x8x1xf32>
    %224 = vector.shape_cast %223 : vector<1x8x1xf32> to vector<8x1xf32>
    %225 = vector.extract_strided_slice %215 {offsets = [1, 0], sizes = [1, 256], strides = [1, 1]} : vector<4x256xf32> to vector<1x256xf32>
    %226 = vector.broadcast %224 : vector<8x1xf32> to vector<8x256xf32>
    %227 = vector.broadcast %225 : vector<1x256xf32> to vector<8x256xf32>
    %228 = arith.mulf %226, %227 : vector<8x256xf32>
    %229 = arith.addf %222, %228 : vector<8x256xf32>
    %230 = vector.extract_strided_slice %2 {offsets = [6, 0, 2], sizes = [1, 8, 1], strides = [1, 1, 1]} : vector<9x8x4xf32> to vector<1x8x1xf32>
    %231 = vector.shape_cast %230 : vector<1x8x1xf32> to vector<8x1xf32>
    %232 = vector.extract_strided_slice %215 {offsets = [2, 0], sizes = [1, 256], strides = [1, 1]} : vector<4x256xf32> to vector<1x256xf32>
    %233 = vector.broadcast %231 : vector<8x1xf32> to vector<8x256xf32>
    %234 = vector.broadcast %232 : vector<1x256xf32> to vector<8x256xf32>
    %235 = arith.mulf %233, %234 : vector<8x256xf32>
    %236 = arith.addf %229, %235 : vector<8x256xf32>
    %237 = vector.extract_strided_slice %2 {offsets = [6, 0, 3], sizes = [1, 8, 1], strides = [1, 1, 1]} : vector<9x8x4xf32> to vector<1x8x1xf32>
    %238 = vector.shape_cast %237 : vector<1x8x1xf32> to vector<8x1xf32>
    %239 = vector.extract_strided_slice %215 {offsets = [3, 0], sizes = [1, 256], strides = [1, 1]} : vector<4x256xf32> to vector<1x256xf32>
    %240 = vector.broadcast %238 : vector<8x1xf32> to vector<8x256xf32>
    %241 = vector.broadcast %239 : vector<1x256xf32> to vector<8x256xf32>
    %242 = arith.mulf %240, %241 : vector<8x256xf32>
    %243 = arith.addf %236, %242 : vector<8x256xf32>
    %c240_i32 = arith.constant 240 : i32
    %244 = tpu.dynamic_rotate %1 by %c240_i32 dim 1 : vector<4x256xf32>, i32 -> vector<4x256xf32>
    %c15_i32_21 = arith.constant 15 : i32
    %245 = vector.broadcast %c15_i32_21 : i32 to vector<4x256xi32>
    %246 = arith.cmpi slt, %7, %245 : vector<4x256xi32>
    %cst_22 = arith.constant 0.000000e+00 : f32
    %247 = vector.broadcast %cst_22 : f32 to vector<4x256xf32>
    %248 = arith.select %246, %244, %247 : vector<4x256xi1>, vector<4x256xf32>
    %249 = vector.extract_strided_slice %2 {offsets = [7, 0, 0], sizes = [1, 8, 1], strides = [1, 1, 1]} : vector<9x8x4xf32> to vector<1x8x1xf32>
    %250 = vector.shape_cast %249 : vector<1x8x1xf32> to vector<8x1xf32>
    %251 = vector.extract_strided_slice %248 {offsets = [0, 0], sizes = [1, 256], strides = [1, 1]} : vector<4x256xf32> to vector<1x256xf32>
    %252 = vector.broadcast %250 : vector<8x1xf32> to vector<8x256xf32>
    %253 = vector.broadcast %251 : vector<1x256xf32> to vector<8x256xf32>
    %254 = arith.mulf %252, %253 : vector<8x256xf32>
    %255 = arith.addf %243, %254 : vector<8x256xf32>
    %256 = vector.extract_strided_slice %2 {offsets = [7, 0, 1], sizes = [1, 8, 1], strides = [1, 1, 1]} : vector<9x8x4xf32> to vector<1x8x1xf32>
    %257 = vector.shape_cast %256 : vector<1x8x1xf32> to vector<8x1xf32>
    %258 = vector.extract_strided_slice %248 {offsets = [1, 0], sizes = [1, 256], strides = [1, 1]} : vector<4x256xf32> to vector<1x256xf32>
    %259 = vector.broadcast %257 : vector<8x1xf32> to vector<8x256xf32>
    %260 = vector.broadcast %258 : vector<1x256xf32> to vector<8x256xf32>
    %261 = arith.mulf %259, %260 : vector<8x256xf32>
    %262 = arith.addf %255, %261 : vector<8x256xf32>
    %263 = vector.extract_strided_slice %2 {offsets = [7, 0, 2], sizes = [1, 8, 1], strides = [1, 1, 1]} : vector<9x8x4xf32> to vector<1x8x1xf32>
    %264 = vector.shape_cast %263 : vector<1x8x1xf32> to vector<8x1xf32>
    %265 = vector.extract_strided_slice %248 {offsets = [2, 0], sizes = [1, 256], strides = [1, 1]} : vector<4x256xf32> to vector<1x256xf32>
    %266 = vector.broadcast %264 : vector<8x1xf32> to vector<8x256xf32>
    %267 = vector.broadcast %265 : vector<1x256xf32> to vector<8x256xf32>
    %268 = arith.mulf %266, %267 : vector<8x256xf32>
    %269 = arith.addf %262, %268 : vector<8x256xf32>
    %270 = vector.extract_strided_slice %2 {offsets = [7, 0, 3], sizes = [1, 8, 1], strides = [1, 1, 1]} : vector<9x8x4xf32> to vector<1x8x1xf32>
    %271 = vector.shape_cast %270 : vector<1x8x1xf32> to vector<8x1xf32>
    %272 = vector.extract_strided_slice %248 {offsets = [3, 0], sizes = [1, 256], strides = [1, 1]} : vector<4x256xf32> to vector<1x256xf32>
    %273 = vector.broadcast %271 : vector<8x1xf32> to vector<8x256xf32>
    %274 = vector.broadcast %272 : vector<1x256xf32> to vector<8x256xf32>
    %275 = arith.mulf %273, %274 : vector<8x256xf32>
    %276 = arith.addf %269, %275 : vector<8x256xf32>
    %c239_i32 = arith.constant 239 : i32
    %277 = tpu.dynamic_rotate %1 by %c239_i32 dim 1 : vector<4x256xf32>, i32 -> vector<4x256xf32>
    %c15_i32_23 = arith.constant 15 : i32
    %278 = vector.broadcast %c15_i32_23 : i32 to vector<4x256xi32>
    %279 = arith.cmpi slt, %7, %278 : vector<4x256xi32>
    %c15_i32_24 = arith.constant 15 : i32
    %280 = vector.broadcast %c15_i32_24 : i32 to vector<4x256xi32>
    %281 = arith.cmpi slt, %5, %280 : vector<4x256xi32>
    %282 = arith.andi %279, %281 : vector<4x256xi1>
    %cst_25 = arith.constant 0.000000e+00 : f32
    %283 = vector.broadcast %cst_25 : f32 to vector<4x256xf32>
    %284 = arith.select %282, %277, %283 : vector<4x256xi1>, vector<4x256xf32>
    %285 = vector.extract_strided_slice %2 {offsets = [8, 0, 0], sizes = [1, 8, 1], strides = [1, 1, 1]} : vector<9x8x4xf32> to vector<1x8x1xf32>
    %286 = vector.shape_cast %285 : vector<1x8x1xf32> to vector<8x1xf32>
    %287 = vector.extract_strided_slice %284 {offsets = [0, 0], sizes = [1, 256], strides = [1, 1]} : vector<4x256xf32> to vector<1x256xf32>
    %288 = vector.broadcast %286 : vector<8x1xf32> to vector<8x256xf32>
    %289 = vector.broadcast %287 : vector<1x256xf32> to vector<8x256xf32>
    %290 = arith.mulf %288, %289 : vector<8x256xf32>
    %291 = arith.addf %276, %290 : vector<8x256xf32>
    %292 = vector.extract_strided_slice %2 {offsets = [8, 0, 1], sizes = [1, 8, 1], strides = [1, 1, 1]} : vector<9x8x4xf32> to vector<1x8x1xf32>
    %293 = vector.shape_cast %292 : vector<1x8x1xf32> to vector<8x1xf32>
    %294 = vector.extract_strided_slice %284 {offsets = [1, 0], sizes = [1, 256], strides = [1, 1]} : vector<4x256xf32> to vector<1x256xf32>
    %295 = vector.broadcast %293 : vector<8x1xf32> to vector<8x256xf32>
    %296 = vector.broadcast %294 : vector<1x256xf32> to vector<8x256xf32>
    %297 = arith.mulf %295, %296 : vector<8x256xf32>
    %298 = arith.addf %291, %297 : vector<8x256xf32>
    %299 = vector.extract_strided_slice %2 {offsets = [8, 0, 2], sizes = [1, 8, 1], strides = [1, 1, 1]} : vector<9x8x4xf32> to vector<1x8x1xf32>
    %300 = vector.shape_cast %299 : vector<1x8x1xf32> to vector<8x1xf32>
    %301 = vector.extract_strided_slice %284 {offsets = [2, 0], sizes = [1, 256], strides = [1, 1]} : vector<4x256xf32> to vector<1x256xf32>
    %302 = vector.broadcast %300 : vector<8x1xf32> to vector<8x256xf32>
    %303 = vector.broadcast %301 : vector<1x256xf32> to vector<8x256xf32>
    %304 = arith.mulf %302, %303 : vector<8x256xf32>
    %305 = arith.addf %298, %304 : vector<8x256xf32>
    %306 = vector.extract_strided_slice %2 {offsets = [8, 0, 3], sizes = [1, 8, 1], strides = [1, 1, 1]} : vector<9x8x4xf32> to vector<1x8x1xf32>
    %307 = vector.shape_cast %306 : vector<1x8x1xf32> to vector<8x1xf32>
    %308 = vector.extract_strided_slice %284 {offsets = [3, 0], sizes = [1, 256], strides = [1, 1]} : vector<4x256xf32> to vector<1x256xf32>
    %309 = vector.broadcast %307 : vector<8x1xf32> to vector<8x256xf32>
    %310 = vector.broadcast %308 : vector<1x256xf32> to vector<8x256xf32>
    %311 = arith.mulf %309, %310 : vector<8x256xf32>
    %312 = arith.addf %305, %311 : vector<8x256xf32>
    %c0_26 = arith.constant 0 : index
    %c0_27 = arith.constant 0 : index
    %313 = vector.load %arg3[%c0_26, %c0_27] : memref<8x1xf32, #tpu.memory_space<vmem>>, vector<8x1xf32>
    %314 = vector.broadcast %313 : vector<8x1xf32> to vector<8x256xf32>
    %315 = arith.addf %312, %314 : vector<8x256xf32>
    %cst_28 = arith.constant 0.000000e+00 : f32
    %316 = vector.broadcast %cst_28 : f32 to vector<8x256xf32>
    %317 = arith.maximumf %315, %316 : vector<8x256xf32>
    %c0_29 = arith.constant 0 : index
    %c0_30 = arith.constant 0 : index
    %c0_31 = arith.constant 0 : index
    %318 = vector.load %arg4[%c0_29, %c0_30, %c0_31] : memref<1x8x256xf32, #tpu.memory_space<vmem>>, vector<1x8x256xf32>
    %319 = vector.shape_cast %318 : vector<1x8x256xf32> to vector<8x256xf32>
    %320 = vector.shape_cast %317 : vector<8x256xf32> to vector<1x8x256xf32>
    tpu.vector_store %arg4[%c0_29, %c0_30, %c0_31], %320 {strides = array<i32>} : memref<1x8x256xf32, #tpu.memory_space<vmem>>, vector<1x8x256xf32>,
    return
  }
  func.func @transform_0(%arg0: i32) -> (i32, i32, i32) {
    %c0_i32 = arith.constant 0 : i32
    %c0_i32_0 = arith.constant 0 : i32
    %c0_i32_1 = arith.constant 0 : i32
    return %arg0, %c0_i32, %c0_i32_0 : i32, i32, i32
  }
  func.func @transform_1(%arg0: i32) -> (i32, i32, i32) {
    %c0_i32 = arith.constant 0 : i32
    %c0_i32_0 = arith.constant 0 : i32
    %c0_i32_1 = arith.constant 0 : i32
    %c0_i32_2 = arith.constant 0 : i32
    return %c0_i32, %c0_i32_0, %c0_i32_1 : i32, i32, i32
  }
  func.func @transform_2(%arg0: i32) -> (i32, i32) {
    %c0_i32 = arith.constant 0 : i32
    %c0_i32_0 = arith.constant 0 : i32
    %c0_i32_1 = arith.constant 0 : i32
    return %c0_i32, %c0_i32_0 : i32, i32
  }
  func.func @transform_3(%arg0: i32) -> (i32, i32, i32) {
    %c0_i32 = arith.constant 0 : i32
    %c0_i32_0 = arith.constant 0 : i32
    %c0_i32_1 = arith.constant 0 : i32
    return %arg0, %c0_i32, %c0_i32_0 : i32, i32, i32
  }
}

</mosaic_0001>

<llo_original>
// kernel: configurable_nn_forward.1
$region0: #{configurable_nn_forward.1}
  #allocation0 [shape = 'u32[]', space=smem, size = 0x4, offset = 0x4, fixed_abs, tag = 'smem constant byte address 0x4 - core index']
  #allocation1 [shape = 'u32[72,128]{1,0:T(1,128)}', space=vmem, size = 0x9000, scoped, tag = 'internal scratch']
  %s0 = inlined_call_operand.vmem [shape: f32[2,4,256], index: 0, kind: input, shape index: {}]
  %s1 = inlined_call_operand.vmem [shape: f32[9,8,4], index: 1, kind: input, shape index: {}]
  %s2 = inlined_call_operand.vmem [shape: f32[8,1], index: 2, kind: input, shape index: {}]
  %s3 = inlined_call_operand.vmem [shape: f32[2,8,256], index: 3, kind: output, shape index: {}]
  %s4 = sld [smem:[#allocation0]]
  $region45: #{configurable_nn_forward.1} parent=0
    _
  %s6 = ssub.s32 1, %s4
  %s7 = scalar_select 0, %s6, %s4
  loop: start=0, step=1, limit=4
  $region2: #{configurable_nn_forward.1} parent=0 // loop_pre_header
    _
  $region3: #{configurable_nn_forward.1} parent=0 // loop_header
    %s9 = sphi 0, %s13
    %p10 = scmp.ge.s32.totalorder %s9, 4
    %s19 = sphi 0, %s21
    %s22 = sphi 0, %s19
    %s23 = sphi 0, %s22
    %s39 = sphi 0, %s23
    %s43 = sphi 0, %s43
    %s45 = sphi 0, %s43
    %s46 = sphi 0, %s45
    %s60 = sphi 0, %s46
    %s64 = sphi 0, %s64
    %s66 = sphi 0, %s64
    %s67 = sphi 0, %s66
    %s81 = sphi 0, %s67
    %s87 = sphi 0, %s89
    %s90 = sphi 0, %s87
    %s91 = sphi 0, %s90
    %s107 = sphi 0, %s91
  $region4: #{configurable_nn_forward.1} parent=0 // loop_header_branch
    %12 = sbr.rel (%p10) target = $region8
  $region5: #{configurable_nn_forward.1} parent=0 // loop_body
    %s14 = ssub.s32 %s9, 1
    %s15 = ssub.s32 %s9, 2
    %s16 = sadd.s32 %s9, 1
    %s17 = ssub.s32 %s9, %s16
    %p18 = scmp.eq.s32.totalorder %s17, 0
    %s20 = sadd.s32 %s19, 1
    %s21 = scalar_select %p18, %s19, %s20
    %p24 = pneg %p18
    %p25 = scmp.eq.s32.totalorder %s9, 1
    %p26 = por %p24, %p25
    %p27 = scmp.ne.s32.totalorder %s19, %s22
    %p28 = scmp.eq.s32.totalorder %s9, 0
    %p29 = por %p27, %p28
    %p30 = scmp.ne.s32.totalorder %s19, %s22
    %p31 = scmp.eq.s32.totalorder %s14, 1
    %p32 = por %p30, %p31
    %p33 = scmp.ne.s32.totalorder %s22, %s23
    %p34 = scmp.eq.s32.totalorder %s14, 0
    %p35 = por %p33, %p34
    %p36 = scmp.ne.s32.totalorder %s22, %s23
    %p37 = scmp.eq.s32.totalorder %s15, 1
    %p38 = por %p36, %p37
    %p40 = scmp.ne.s32.totalorder %s23, %s39
    %p41 = scmp.eq.s32.totalorder %s15, 0
    %p42 = por %p40, %p41
    %s44 = sadd.s32 %s43, 1
    %p47 = scmp.eq.s32.totalorder %s9, 1
    %p48 = scmp.ne.s32.totalorder %s43, %s45
    %p49 = scmp.eq.s32.totalorder %s9, 0
    %p50 = por %p48, %p49
    %p51 = scmp.ne.s32.totalorder %s43, %s45
    %p52 = scmp.eq.s32.totalorder %s14, 1
    %p53 = por %p51, %p52
    %p54 = scmp.ne.s32.totalorder %s45, %s46
    %p55 = scmp.eq.s32.totalorder %s14, 0
    %p56 = por %p54, %p55
    %p57 = scmp.ne.s32.totalorder %s45, %s46
    %p58 = scmp.eq.s32.totalorder %s15, 1
    %p59 = por %p57, %p58
    %p61 = scmp.ne.s32.totalorder %s46, %s60
    %p62 = scmp.eq.s32.totalorder %s15, 0
    %p63 = por %p61, %p62
    %s65 = sadd.s32 %s64, 1
    %p68 = scmp.eq.s32.totalorder %s9, 1
    %p69 = scmp.ne.s32.totalorder %s64, %s66
    %p70 = scmp.eq.s32.totalorder %s9, 0
    %p71 = por %p69, %p70
    %p72 = scmp.ne.s32.totalorder %s64, %s66
    %p73 = scmp.eq.s32.totalorder %s14, 1
    %p74 = por %p72, %p73
    %p75 = scmp.ne.s32.totalorder %s66, %s67
    %p76 = scmp.eq.s32.totalorder %s14, 0
    %p77 = por %p75, %p76
    %p78 = scmp.ne.s32.totalorder %s66, %s67
    %p79 = scmp.eq.s32.totalorder %s15, 1
    %p80 = por %p78, %p79
    %p82 = scmp.ne.s32.totalorder %s67, %s81
    %p83 = scmp.eq.s32.totalorder %s15, 0
    %p84 = por %p82, %p83
    %s85 = ssub.s32 %s9, %s16
    %p86 = scmp.eq.s32.totalorder %s85, 0
    %s88 = sadd.s32 %s87, 1
    %s89 = scalar_select %p86, %s87, %s88
    %p92 = pneg %p86
    %p93 = scmp.eq.s32.totalorder %s9, 1
    %p94 = por %p92, %p93
    %p95 = scmp.ne.s32.totalorder %s87, %s90
    %p96 = scmp.eq.s32.totalorder %s9, 0
    %p97 = por %p95, %p96
    %p98 = scmp.ne.s32.totalorder %s87, %s90
    %p99 = scmp.eq.s32.totalorder %s14, 1
    %p100 = por %p98, %p99
    %p101 = scmp.ne.s32.totalorder %s90, %s91
    %p102 = scmp.eq.s32.totalorder %s14, 0
    %p103 = por %p101, %p102
    %p104 = scmp.ne.s32.totalorder %s90, %s91
    %p105 = scmp.eq.s32.totalorder %s15, 1
    %p106 = por %p104, %p105
    %p108 = scmp.ne.s32.totalorder %s91, %s107
    %p109 = scmp.eq.s32.totalorder %s15, 0
    %p110 = por %p108, %p109
    %p111 = scmp.le.s32.totalorder 1, %s9
    %p112 = scmp.lt.s32.totalorder %s9, 3
    %p113 = pnand %p111, %p112
    %p114 = pneg %p113
    // Predicated region
    $region9: #{configurable_nn_forward.1} parent=5 // pred_check
      _
    $region10: #{configurable_nn_forward.1} parent=5 // pred_check_branch
      %116 = sbr.rel (%p113) target = $region12
    $region11: #{configurable_nn_forward.1} parent=5 // pred_region
      %s117 = ssub.s32 %s9, 1
      // Predicated region
      $region13: #{configurable_nn_forward.1} parent=11 // pred_check
        %p118 = pneg %p56
      $region14: #{configurable_nn_forward.1} parent=11 // pred_check_branch
        %120 = sbr.rel (%p118) target = $region16
      $region15: #{configurable_nn_forward.1} parent=11 // pred_region
        _
      $region16: #{configurable_nn_forward.1} parent=11 // pred_fallthru
        _
      // Predicated region
      $region17: #{configurable_nn_forward.1} parent=11 // pred_check
        %p121 = pneg %p77
      $region18: #{configurable_nn_forward.1} parent=11 // pred_check_branch
        %123 = sbr.rel (%p121) target = $region20
      $region19: #{configurable_nn_forward.1} parent=11 // pred_region
        _
      $region20: #{configurable_nn_forward.1} parent=11 // pred_fallthru
        _
    $region12: #{configurable_nn_forward.1} parent=5 // pred_fallthru
      _
    %p124 = scmp.lt.s32.totalorder %s9, 2
    // Predicated region
    $region21: #{configurable_nn_forward.1} parent=5 // pred_check
      %p125 = pneg %p124
    $region22: #{configurable_nn_forward.1} parent=5 // pred_check_branch
      %127 = sbr.rel (%p125) target = $region24
    $region23: #{configurable_nn_forward.1} parent=5 // pred_region
      // Predicated region
      $region25: #{configurable_nn_forward.1} parent=23 // pred_check
        %p128 = pneg %p29
      $region26: #{configurable_nn_forward.1} parent=23 // pred_check_branch
        %130 = sbr.rel (%p128) target = $region28
      $region27: #{configurable_nn_forward.1} parent=23 // pred_region
        %p131 = scmp.lt.s32.totalorder %s9, 1
        %s132 = scalar_select %p131, %s9, 1
        %s133 = smul.addr %s132, 2
        %s134 = smul.addr %s133, 4
        %s135 = scalar_lea.vmem %s0, %s134
      $region28: #{configurable_nn_forward.1} parent=23 // pred_fallthru
        _
    $region24: #{configurable_nn_forward.1} parent=5 // pred_fallthru
      _
    %p136 = scmp.le.s32.totalorder 1, %s9
    %p137 = scmp.lt.s32.totalorder %s9, 3
    %p138 = pnand %p136, %p137
    %p139 = pneg %p138
    // Predicated region
    $region29: #{configurable_nn_forward.1} parent=5 // pred_check
      _
    $region30: #{configurable_nn_forward.1} parent=5 // pred_check_branch
      %141 = sbr.rel (%p138) target = $region32
    $region31: #{configurable_nn_forward.1} parent=5 // pred_region
      %s142 = ssub.s32 %s9, 1
      %p143 = scmp.lt.s32.totalorder %s14, 1
      %s144 = scalar_select %p143, %s14, 1
      %s145 = smul.addr %s144, 2
      %s146 = smul.addr %s145, 4
      %s147 = scalar_lea.vmem %s0, %s146
      %p148 = pneg %p35
      %p149 = pneg %p32
      %p150 = pneg %p56
      %p151 = pneg %p53
      %p152 = pneg %p77
      %p153 = pneg %p74
      %p154 = pneg %p103
      %p155 = pneg %p100
      %p156 = scmp.lt.s32.totalorder %s14, 1
      %s157 = scalar_select %p156, %s14, 1
      %s158 = smul.addr %s157, 2
      %s159 = smul.addr %s158, 8
      %s160 = scalar_lea.vmem %s3, %s159
      %p161 = scmp.lt.s32.totalorder %s14, 1
      %s162 = scalar_select %p161, %s14, 1
      %s163 = smul.addr %s162, 2
      %s164 = smul.addr %s163, 4
      %s165 = scalar_lea.vmem %s0, %s164
      %p166 = scmp.lt.s32.totalorder %s14, 1
      %s167 = scalar_select %p166, %s14, 1
      %s168 = smul.addr %s167, 2
      %s169 = smul.addr %s168, 8
      %s170 = scalar_lea.vmem %s3, %s169
      %v171 = vld [vmem:[%s165] sm:$0xff]
      %v172 = vld [vmem:[%s1] sm:$0xff]
      %v173 = vld [vmem:[%s1 + $0x8] sm:$0xff]
      %v174 = vld [vmem:[%s1 + $0x10] sm:$0xff]
      %v175 = vld [vmem:[%s1 + $0x18] sm:$0xff]
      %v176 = vld [vmem:[%s1 + $0x20] sm:$0xff]
      %v177 = vld [vmem:[%s1 + $0x28] sm:$0xff]
      %v178 = vld [vmem:[%s1 + $0x30] sm:$0xff]
      %v179 = vld [vmem:[%s1 + $0x38] sm:$0xff]
      %v180 = vld [vmem:[%s1 + $0x40] sm:$0xff]
      %v181 = vlaneseq
      %v182 = vand.u32 %v181, 127
      %v183 = vadd.s32 %v182, 128
      %v184 = vand.u32 %v182, 15
      %v185 = vand.u32 %v183, 15
      %v186 = vshra.s32 %v182, 4
      %v187 = vshra.s32 %v183, 4
      %189 = vst [vmem:[#allocation1] ss:$2 sm:$0xff] %v171
      %v190 = vld.sshfl [vmem:[#allocation1] sm:$0xff pattern:$0x75316420]
      %v191 = vld.sshfl [vmem:[#allocation1 + $0x8] sm:$0xff pattern:$0x75316420]
      %194 = vrot.lane.b32.xlu0 %v190, 17
      %v195 = vpop.permute.xlu0 %194
      %196 = vrot.lane.b32.xlu0 %v191, 17
      %v197 = vpop.permute.xlu0 %196
      %vm198 = vcmp.lt.s32.totalorder %v182, 17
      %v199 = vsel %vm198, %v195, %v197
      %v200 = vsel %vm198, %v197, %v195
      %vm201 = vcmp.ge.s32.totalorder %v186, 1
      %vm202 = vcmp.ge.s32.totalorder %v187, 1
      %vm203 = vcmp.ge.s32.totalorder %v184, 1
      %vm204 = vcmp.ge.s32.totalorder %v185, 1
      %vm205 = vmand %vm201, %vm203
      %vm206 = vmand %vm202, %vm204
      %v207 = vsel %vm205, %v200, 0.0
      %v208 = vsel %vm206, %v199, 0.0
      %210 = vset.pattern.permute.xlu0 0
      %211 = vperm.xlu0 %210, %v172
      %v212 = vpop.permute.xlu0 %211
      %v214 = vperm.slane %v207, 0
      %v215 = vperm.slane %v208, 0
      %v216 = vmul.f32 %v212, %v214
      %v217 = vmul.f32 %v212, %v215
      %v218 = vadd.f32 %v216, 0.0
      %v219 = vadd.f32 %v217, 0.0
      %220 = vset.pattern.permute.xlu0 1
      %221 = vperm.xlu0 %220, %v172
      %v222 = vpop.permute.xlu0 %221
      %v224 = vperm.slane %v207, 1
      %v225 = vperm.slane %v208, 1
      %v226 = vmul.f32 %v222, %v224
      %v227 = vmul.f32 %v222, %v225
      %v228 = vadd.f32 %v218, %v226
      %v229 = vadd.f32 %v219, %v227
      %230 = vset.pattern.permute.xlu0 2
      %231 = vperm.xlu0 %230, %v172
      %v232 = vpop.permute.xlu0 %231
      %v234 = vperm.slane %v207, 2
      %v235 = vperm.slane %v208, 2
      %v236 = vmul.f32 %v232, %v234
      %v237 = vmul.f32 %v232, %v235
      %v238 = vadd.f32 %v228, %v236
      %v239 = vadd.f32 %v229, %v237
      %240 = vset.pattern.permute.xlu0 3
      %241 = vperm.xlu0 %240, %v172
      %v242 = vpop.permute.xlu0 %241
      %v244 = vperm.slane %v207, 3
      %v245 = vperm.slane %v208, 3
      %v246 = vmul.f32 %v242, %v244
      %v247 = vmul.f32 %v242, %v245
      %v248 = vadd.f32 %v238, %v246
      %v249 = vadd.f32 %v239, %v247
      %250 = vst [vmem:[#allocation1] ss:$2 sm:$0xff] %v171
      %v251 = vld.sshfl [vmem:[#allocation1] sm:$0xff pattern:$0x75316420]
      %v252 = vld.sshfl [vmem:[#allocation1 + $0x8] sm:$0xff pattern:$0x75316420]
      %255 = vrot.lane.b32.xlu0 %v251, 16
      %v256 = vpop.permute.xlu0 %255
      %257 = vrot.lane.b32.xlu0 %v252, 16
      %v258 = vpop.permute.xlu0 %257
      %vm259 = vcmp.lt.s32.totalorder %v182, 16
      %v260 = vsel %vm259, %v256, %v258
      %v261 = vsel %vm259, %v258, %v256
      %v262 = vsel %vm201, %v261, 0.0
      %v263 = vsel %vm202, %v260, 0.0
      %265 = vset.pattern.permute.xlu0 0
      %266 = vperm.xlu0 %265, %v173
      %v267 = vpop.permute.xlu0 %266
      %v269 = vperm.slane %v262, 0
      %v270 = vperm.slane %v263, 0
      %v271 = vmul.f32 %v267, %v269
      %v272 = vmul.f32 %v267, %v270
      %v273 = vadd.f32 %v248, %v271
      %v274 = vadd.f32 %v249, %v272
      %275 = vset.pattern.permute.xlu0 1
      %276 = vperm.xlu0 %275, %v173
      %v277 = vpop.permute.xlu0 %276
      %v279 = vperm.slane %v262, 1
      %v280 = vperm.slane %v263, 1
      %v281 = vmul.f32 %v277, %v279
      %v282 = vmul.f32 %v277, %v280
      %v283 = vadd.f32 %v273, %v281
      %v284 = vadd.f32 %v274, %v282
      %285 = vset.pattern.permute.xlu0 2
      %286 = vperm.xlu0 %285, %v173
      %v287 = vpop.permute.xlu0 %286
      %v289 = vperm.slane %v262, 2
      %v290 = vperm.slane %v263, 2
      %v291 = vmul.f32 %v287, %v289
      %v292 = vmul.f32 %v287, %v290
      %v293 = vadd.f32 %v283, %v291
      %v294 = vadd.f32 %v284, %v292
      %295 = vset.pattern.permute.xlu0 3
      %296 = vperm.xlu0 %295, %v173
      %v297 = vpop.permute.xlu0 %296
      %v299 = vperm.slane %v262, 3
      %v300 = vperm.slane %v263, 3
      %v301 = vmul.f32 %v297, %v299
      %v302 = vmul.f32 %v297, %v300
      %v303 = vadd.f32 %v293, %v301
      %v304 = vadd.f32 %v294, %v302
      %305 = vst [vmem:[#allocation1] ss:$2 sm:$0xff] %v171
      %v306 = vld.sshfl [vmem:[#allocation1] sm:$0xff pattern:$0x75316420]
      %v307 = vld.sshfl [vmem:[#allocation1 + $0x8] sm:$0xff pattern:$0x75316420]
      %310 = vrot.lane.b32.xlu0 %v306, 15
      %v311 = vpop.permute.xlu0 %310
      %312 = vrot.lane.b32.xlu0 %v307, 15
      %v313 = vpop.permute.xlu0 %312
      %vm314 = vcmp.lt.s32.totalorder %v182, 15
      %v315 = vsel %vm314, %v311, %v313
      %v316 = vsel %vm314, %v313, %v311
      %vm317 = vcmp.lt.s32.totalorder %v184, 15
      %vm318 = vcmp.lt.s32.totalorder %v185, 15
      %vm319 = vmand %vm201, %vm317
      %vm320 = vmand %vm202, %vm318
      %v321 = vsel %vm319, %v316, 0.0
      %v322 = vsel %vm320, %v315, 0.0
      %324 = vset.pattern.permute.xlu0 0
      %325 = vperm.xlu0 %324, %v174
      %v326 = vpop.permute.xlu0 %325
      %v328 = vperm.slane %v321, 0
      %v329 = vperm.slane %v322, 0
      %v330 = vmul.f32 %v326, %v328
      %v331 = vmul.f32 %v326, %v329
      %v332 = vadd.f32 %v303, %v330
      %v333 = vadd.f32 %v304, %v331
      %334 = vset.pattern.permute.xlu0 1
      %335 = vperm.xlu0 %334, %v174
      %v336 = vpop.permute.xlu0 %335
      %v338 = vperm.slane %v321, 1
      %v339 = vperm.slane %v322, 1
      %v340 = vmul.f32 %v336, %v338
      %v341 = vmul.f32 %v336, %v339
      %v342 = vadd.f32 %v332, %v340
      %v343 = vadd.f32 %v333, %v341
      %344 = vset.pattern.permute.xlu0 2
      %345 = vperm.xlu0 %344, %v174
      %v346 = vpop.permute.xlu0 %345
      %v348 = vperm.slane %v321, 2
      %v349 = vperm.slane %v322, 2
      %v350 = vmul.f32 %v346, %v348
      %v351 = vmul.f32 %v346, %v349
      %v352 = vadd.f32 %v342, %v350
      %v353 = vadd.f32 %v343, %v351
      %354 = vset.pattern.permute.xlu0 3
      %355 = vperm.xlu0 %354, %v174
      %v356 = vpop.permute.xlu0 %355
      %v358 = vperm.slane %v321, 3
      %v359 = vperm.slane %v322, 3
      %v360 = vmul.f32 %v356, %v358
      %v361 = vmul.f32 %v356, %v359
      %v362 = vadd.f32 %v352, %v360
      %v363 = vadd.f32 %v353, %v361
      %364 = vst [vmem:[#allocation1] ss:$2 sm:$0xff] %v171
      %v365 = vld.sshfl [vmem:[#allocation1] sm:$0xff pattern:$0x75316420]
      %v366 = vld.sshfl [vmem:[#allocation1 + $0x8] sm:$0xff pattern:$0x75316420]
      %369 = vrot.lane.b32.xlu0 %v365, 1
      %v370 = vpop.permute.xlu0 %369
      %371 = vrot.lane.b32.xlu0 %v366, 1
      %v372 = vpop.permute.xlu0 %371
      %vm373 = vcmp.lt.s32.totalorder %v182, 1
      %v374 = vsel %vm373, %v370, %v372
      %v375 = vsel %vm373, %v372, %v370
      %v376 = vsel %vm203, %v375, 0.0
      %v377 = vsel %vm204, %v374, 0.0
      %379 = vset.pattern.permute.xlu0 0
      %380 = vperm.xlu0 %379, %v175
      %v381 = vpop.permute.xlu0 %380
      %v383 = vperm.slane %v376, 0
      %v384 = vperm.slane %v377, 0
      %v385 = vmul.f32 %v381, %v383
      %v386 = vmul.f32 %v381, %v384
      %v387 = vadd.f32 %v362, %v385
      %v388 = vadd.f32 %v363, %v386
      %389 = vset.pattern.permute.xlu0 1
      %390 = vperm.xlu0 %389, %v175
      %v391 = vpop.permute.xlu0 %390
      %v393 = vperm.slane %v376, 1
      %v394 = vperm.slane %v377, 1
      %v395 = vmul.f32 %v391, %v393
      %v396 = vmul.f32 %v391, %v394
      %v397 = vadd.f32 %v387, %v395
      %v398 = vadd.f32 %v388, %v396
      %399 = vset.pattern.permute.xlu0 2
      %400 = vperm.xlu0 %399, %v175
      %v401 = vpop.permute.xlu0 %400
      %v403 = vperm.slane %v376, 2
      %v404 = vperm.slane %v377, 2
      %v405 = vmul.f32 %v401, %v403
      %v406 = vmul.f32 %v401, %v404
      %v407 = vadd.f32 %v397, %v405
      %v408 = vadd.f32 %v398, %v406
      %409 = vset.pattern.permute.xlu0 3
      %410 = vperm.xlu0 %409, %v175
      %v411 = vpop.permute.xlu0 %410
      %v413 = vperm.slane %v376, 3
      %v414 = vperm.slane %v377, 3
      %v415 = vmul.f32 %v411, %v413
      %v416 = vmul.f32 %v411, %v414
      %v417 = vadd.f32 %v407, %v415
      %v418 = vadd.f32 %v408, %v416
      %420 = vset.pattern.permute.xlu0 0
      %421 = vperm.xlu0 %420, %v176
      %v422 = vpop.permute.xlu0 %421
      %v424 = vperm.slane %v171, 0
      %v425 = vperm.slane %v171, 4
      %v428 = vperm.slane %v424, 0
      %v429 = vperm.slane %v425, 0
      %v430 = vmul.f32 %v422, %v428
      %v431 = vmul.f32 %v422, %v429
      %v432 = vadd.f32 %v417, %v430
      %v433 = vadd.f32 %v418, %v431
      %434 = vset.pattern.permute.xlu0 1
      %435 = vperm.xlu0 %434, %v176
      %v436 = vpop.permute.xlu0 %435
      %v438 = vperm.slane %v171, 1
      %v439 = vperm.slane %v171, 5
      %v442 = vperm.slane %v438, 1
      %v443 = vperm.slane %v439, 1
      %v444 = vmul.f32 %v436, %v442
      %v445 = vmul.f32 %v436, %v443
      %v446 = vadd.f32 %v432, %v444
      %v447 = vadd.f32 %v433, %v445
      %448 = vset.pattern.permute.xlu0 2
      %449 = vperm.xlu0 %448, %v176
      %v450 = vpop.permute.xlu0 %449
      %v452 = vperm.slane %v171, 2
      %v453 = vperm.slane %v171, 6
      %v456 = vperm.slane %v452, 2
      %v457 = vperm.slane %v453, 2
      %v458 = vmul.f32 %v450, %v456
      %v459 = vmul.f32 %v450, %v457
      %v460 = vadd.f32 %v446, %v458
      %v461 = vadd.f32 %v447, %v459
      %462 = vset.pattern.permute.xlu0 3
      %463 = vperm.xlu0 %462, %v176
      %v464 = vpop.permute.xlu0 %463
      %v466 = vperm.slane %v171, 3
      %v467 = vperm.slane %v171, 7
      %v470 = vperm.slane %v466, 3
      %v471 = vperm.slane %v467, 3
      %v472 = vmul.f32 %v464, %v470
      %v473 = vmul.f32 %v464, %v471
      %v474 = vadd.f32 %v460, %v472
      %v475 = vadd.f32 %v461, %v473
      %476 = vst [vmem:[#allocation1] ss:$2 sm:$0xff] %v171
      %v477 = vld.sshfl [vmem:[#allocation1] sm:$0xff pattern:$0x75316420]
      %v478 = vld.sshfl [vmem:[#allocation1 + $0x8] sm:$0xff pattern:$0x75316420]
      %481 = vrot.lane.b32.xlu0 %v477, 127
      %v482 = vpop.permute.xlu0 %481
      %483 = vrot.lane.b32.xlu0 %v478, 127
      %v484 = vpop.permute.xlu0 %483
      %vm485 = vcmp.lt.s32.totalorder %v182, 127
      %v486 = vsel %vm485, %v482, %v484
      %v487 = vsel %vm485, %v484, %v482
      %v488 = vsel %vm317, %v486, 0.0
      %v489 = vsel %vm318, %v487, 0.0
      %491 = vset.pattern.permute.xlu0 0
      %492 = vperm.xlu0 %491, %v177
      %v493 = vpop.permute.xlu0 %492
      %v495 = vperm.slane %v488, 0
      %v496 = vperm.slane %v489, 0
      %v497 = vmul.f32 %v493, %v495
      %v498 = vmul.f32 %v493, %v496
      %v499 = vadd.f32 %v474, %v497
      %v500 = vadd.f32 %v475, %v498
      %501 = vset.pattern.permute.xlu0 1
      %502 = vperm.xlu0 %501, %v177
      %v503 = vpop.permute.xlu0 %502
      %v505 = vperm.slane %v488, 1
      %v506 = vperm.slane %v489, 1
      %v507 = vmul.f32 %v503, %v505
      %v508 = vmul.f32 %v503, %v506
      %v509 = vadd.f32 %v499, %v507
      %v510 = vadd.f32 %v500, %v508
      %511 = vset.pattern.permute.xlu0 2
      %512 = vperm.xlu0 %511, %v177
      %v513 = vpop.permute.xlu0 %512
      %v515 = vperm.slane %v488, 2
      %v516 = vperm.slane %v489, 2
      %v517 = vmul.f32 %v513, %v515
      %v518 = vmul.f32 %v513, %v516
      %v519 = vadd.f32 %v509, %v517
      %v520 = vadd.f32 %v510, %v518
      %521 = vset.pattern.permute.xlu0 3
      %522 = vperm.xlu0 %521, %v177
      %v523 = vpop.permute.xlu0 %522
      %v525 = vperm.slane %v488, 3
      %v526 = vperm.slane %v489, 3
      %v527 = vmul.f32 %v523, %v525
      %v528 = vmul.f32 %v523, %v526
      %v529 = vadd.f32 %v519, %v527
      %v530 = vadd.f32 %v520, %v528
      %531 = vst [vmem:[#allocation1] ss:$2 sm:$0xff] %v171
      %v532 = vld.sshfl [vmem:[#allocation1] sm:$0xff pattern:$0x75316420]
      %v533 = vld.sshfl [vmem:[#allocation1 + $0x8] sm:$0xff pattern:$0x75316420]
      %536 = vrot.lane.b32.xlu0 %v532, 113
      %v537 = vpop.permute.xlu0 %536
      %538 = vrot.lane.b32.xlu0 %v533, 113
      %v539 = vpop.permute.xlu0 %538
      %vm540 = vcmp.lt.s32.totalorder %v182, 113
      %v541 = vsel %vm540, %v537, %v539
      %v542 = vsel %vm540, %v539, %v537
      %vm543 = vcmp.lt.s32.totalorder %v186, 15
      %vm544 = vcmp.lt.s32.totalorder %v187, 15
      %vm545 = vmand %vm543, %vm203
      %vm546 = vmand %vm544, %vm204
      %v547 = vsel %vm545, %v541, 0.0
      %v548 = vsel %vm546, %v542, 0.0
      %550 = vset.pattern.permute.xlu0 0
      %551 = vperm.xlu0 %550, %v178
      %v552 = vpop.permute.xlu0 %551
      %v554 = vperm.slane %v547, 0
      %v555 = vperm.slane %v548, 0
      %v556 = vmul.f32 %v552, %v554
      %v557 = vmul.f32 %v552, %v555
      %v558 = vadd.f32 %v529, %v556
      %v559 = vadd.f32 %v530, %v557
      %560 = vset.pattern.permute.xlu0 1
      %561 = vperm.xlu0 %560, %v178
      %v562 = vpop.permute.xlu0 %561
      %v564 = vperm.slane %v547, 1
      %v565 = vperm.slane %v548, 1
      %v566 = vmul.f32 %v562, %v564
      %v567 = vmul.f32 %v562, %v565
      %v568 = vadd.f32 %v558, %v566
      %v569 = vadd.f32 %v559, %v567
      %570 = vset.pattern.permute.xlu0 2
      %571 = vperm.xlu0 %570, %v178
      %v572 = vpop.permute.xlu0 %571
      %v574 = vperm.slane %v547, 2
      %v575 = vperm.slane %v548, 2
      %v576 = vmul.f32 %v572, %v574
      %v577 = vmul.f32 %v572, %v575
      %v578 = vadd.f32 %v568, %v576
      %v579 = vadd.f32 %v569, %v577
      %580 = vset.pattern.permute.xlu0 3
      %581 = vperm.xlu0 %580, %v178
      %v582 = vpop.permute.xlu0 %581
      %v584 = vperm.slane %v547, 3
      %v585 = vperm.slane %v548, 3
      %v586 = vmul.f32 %v582, %v584
      %v587 = vmul.f32 %v582, %v585
      %v588 = vadd.f32 %v578, %v586
      %v589 = vadd.f32 %v579, %v587
      %590 = vst [vmem:[#allocation1] ss:$2 sm:$0xff] %v171
      %v591 = vld.sshfl [vmem:[#allocation1] sm:$0xff pattern:$0x75316420]
      %v592 = vld.sshfl [vmem:[#allocation1 + $0x8] sm:$0xff pattern:$0x75316420]
      %595 = vrot.lane.b32.xlu0 %v591, 112
      %v596 = vpop.permute.xlu0 %595
      %597 = vrot.lane.b32.xlu0 %v592, 112
      %v598 = vpop.permute.xlu0 %597
      %vm599 = vcmp.lt.s32.totalorder %v182, 112
      %v600 = vsel %vm599, %v596, %v598
      %v601 = vsel %vm599, %v598, %v596
      %v602 = vsel %vm543, %v600, 0.0
      %v603 = vsel %vm544, %v601, 0.0
      %605 = vset.pattern.permute.xlu0 0
      %606 = vperm.xlu0 %605, %v179
      %v607 = vpop.permute.xlu0 %606
      %v609 = vperm.slane %v602, 0
      %v610 = vperm.slane %v603, 0
      %v611 = vmul.f32 %v607, %v609
      %v612 = vmul.f32 %v607, %v610
      %v613 = vadd.f32 %v588, %v611
      %v614 = vadd.f32 %v589, %v612
      %615 = vset.pattern.permute.xlu0 1
      %616 = vperm.xlu0 %615, %v179
      %v617 = vpop.permute.xlu0 %616
      %v619 = vperm.slane %v602, 1
      %v620 = vperm.slane %v603, 1
      %v621 = vmul.f32 %v617, %v619
      %v622 = vmul.f32 %v617, %v620
      %v623 = vadd.f32 %v613, %v621
      %v624 = vadd.f32 %v614, %v622
      %625 = vset.pattern.permute.xlu0 2
      %626 = vperm.xlu0 %625, %v179
      %v627 = vpop.permute.xlu0 %626
      %v629 = vperm.slane %v602, 2
      %v630 = vperm.slane %v603, 2
      %v631 = vmul.f32 %v627, %v629
      %v632 = vmul.f32 %v627, %v630
      %v633 = vadd.f32 %v623, %v631
      %v634 = vadd.f32 %v624, %v632
      %635 = vset.pattern.permute.xlu0 3
      %636 = vperm.xlu0 %635, %v179
      %v637 = vpop.permute.xlu0 %636
      %v639 = vperm.slane %v602, 3
      %v640 = vperm.slane %v603, 3
      %v641 = vmul.f32 %v637, %v639
      %v642 = vmul.f32 %v637, %v640
      %v643 = vadd.f32 %v633, %v641
      %v644 = vadd.f32 %v634, %v642
      %645 = vst [vmem:[#allocation1] ss:$2 sm:$0xff] %v171
      %v646 = vld.sshfl [vmem:[#allocation1] sm:$0xff pattern:$0x75316420]
      %v647 = vld.sshfl [vmem:[#allocation1 + $0x8] sm:$0xff pattern:$0x75316420]
      %650 = vrot.lane.b32.xlu0 %v646, 111
      %v651 = vpop.permute.xlu0 %650
      %652 = vrot.lane.b32.xlu0 %v647, 111
      %v653 = vpop.permute.xlu0 %652
      %vm654 = vcmp.lt.s32.totalorder %v182, 111
      %v655 = vsel %vm654, %v651, %v653
      %v656 = vsel %vm654, %v653, %v651
      %vm657 = vmand %vm543, %vm317
      %vm658 = vmand %vm544, %vm318
      %v659 = vsel %vm657, %v655, 0.0
      %v660 = vsel %vm658, %v656, 0.0
      %662 = vset.pattern.permute.xlu0 0
      %663 = vperm.xlu0 %662, %v180
      %v664 = vpop.permute.xlu0 %663
      %v666 = vperm.slane %v659, 0
      %v667 = vperm.slane %v660, 0
      %v668 = vmul.f32 %v664, %v666
      %v669 = vmul.f32 %v664, %v667
      %v670 = vadd.f32 %v643, %v668
      %v671 = vadd.f32 %v644, %v669
      %672 = vset.pattern.permute.xlu0 1
      %673 = vperm.xlu0 %672, %v180
      %v674 = vpop.permute.xlu0 %673
      %v676 = vperm.slane %v659, 1
      %v677 = vperm.slane %v660, 1
      %v678 = vmul.f32 %v674, %v676
      %v679 = vmul.f32 %v674, %v677
      %v680 = vadd.f32 %v670, %v678
      %v681 = vadd.f32 %v671, %v679
      %682 = vset.pattern.permute.xlu0 2
      %683 = vperm.xlu0 %682, %v180
      %v684 = vpop.permute.xlu0 %683
      %v686 = vperm.slane %v659, 2
      %v687 = vperm.slane %v660, 2
      %v688 = vmul.f32 %v684, %v686
      %v689 = vmul.f32 %v684, %v687
      %v690 = vadd.f32 %v680, %v688
      %v691 = vadd.f32 %v681, %v689
      %692 = vset.pattern.permute.xlu0 3
      %693 = vperm.xlu0 %692, %v180
      %v694 = vpop.permute.xlu0 %693
      %v696 = vperm.slane %v659, 3
      %v697 = vperm.slane %v660, 3
      %v698 = vmul.f32 %v694, %v696
      %v699 = vmul.f32 %v694, %v697
      %v700 = vadd.f32 %v690, %v698
      %v701 = vadd.f32 %v691, %v699
      %v702 = vld [vmem:[%s2] sm:$0xff]
      %704 = vset.pattern.permute.xlu0 0
      %705 = vperm.xlu0 %704, %v702
      %v706 = vpop.permute.xlu0 %705
      %v708 = vadd.f32 %v700, %v706
      %v709 = vadd.f32 %v701, %v706
      %v710 = vmax.f32 %v708, 0.0
      %v711 = vmax.f32 %v709, 0.0
      %712 = vst [vmem:[%s170] sm:$0xff] %v710
      %713 = vst [vmem:[%s170 + $0x8] sm:$0xff] %v711
      %p714 = scmp.lt.s32.totalorder %s14, 1
      %s715 = scalar_select %p714, %s14, 1
      %s716 = smul.addr %s715, 2
      %s717 = smul.addr %s716, 8
      %s718 = scalar_lea.vmem %s3, %s717
      // Predicated region
      $region33: #{configurable_nn_forward.1} parent=31 // pred_check
        %p719 = pneg %p100
      $region34: #{configurable_nn_forward.1} parent=31 // pred_check_branch
        %721 = sbr.rel (%p719) target = $region36
      $region35: #{configurable_nn_forward.1} parent=31 // pred_region
        _
      $region36: #{configurable_nn_forward.1} parent=31 // pred_fallthru
        _
    $region32: #{configurable_nn_forward.1} parent=5 // pred_fallthru
      _
    %p722 = scmp.le.s32.totalorder 2, %s9
    // Predicated region
    $region37: #{configurable_nn_forward.1} parent=5 // pred_check
      %p723 = pneg %p722
    $region38: #{configurable_nn_forward.1} parent=5 // pred_check_branch
      %725 = sbr.rel (%p723) target = $region40
    $region39: #{configurable_nn_forward.1} parent=5 // pred_region
      %s726 = ssub.s32 %s9, 2
      // Predicated region
      $region41: #{configurable_nn_forward.1} parent=39 // pred_check
        %p727 = pneg %p106
      $region42: #{configurable_nn_forward.1} parent=39 // pred_check_branch
        %729 = sbr.rel (%p727) target = $region44
      $region43: #{configurable_nn_forward.1} parent=39 // pred_region
        %p730 = scmp.lt.s32.totalorder %s15, 1
        %s731 = scalar_select %p730, %s15, 1
        %s732 = smul.addr %s731, 2
        %s733 = smul.addr %s732, 8
        %s734 = scalar_lea.vmem %s3, %s733
      $region44: #{configurable_nn_forward.1} parent=39 // pred_fallthru
        _
    $region40: #{configurable_nn_forward.1} parent=5 // pred_fallthru
      _
  $region6: #{configurable_nn_forward.1} parent=0 // loop_footer
    %s13 = sadd.s32 1, %s9
  $region7: #{configurable_nn_forward.1} parent=0 // loop_footer_branch
    %8 = sbr.rel target = $region3
  $region8: #{configurable_nn_forward.1} parent=0 // loop_exit
    _

</llo_original>
